<compile_context>
chip_gen: v5e
topology: v5e:2x2
jax: 0.10.0
libtpu: 0.0.40
codegen_flags: <defaults>
</compile_context>

<pallas_src>
import functools
import math

import jax
import jax.numpy as jnp
from jax import lax
from jax.experimental import pallas as pl
from jax.experimental.pallas import tpu as pltpu


# ----------------------------------------------------------------------------------
# Static model structure (mirrors DBLPModel)
# ----------------------------------------------------------------------------------
METAPATH_LIST = ([0, 1, 0], [0, 1, 2, 1, 0], [0, 1, 3, 1, 0])
EDGE_TYPE_LIST = ([0, 1], [0, 2, 3, 1], [0, 4, 5, 1])
EDGE_SRC_DST = {0: (0, 1), 1: (1, 0), 2: (1, 2), 3: (2, 1), 4: (1, 3), 5: (3, 1)}
NUM_EDGE_TYPES = 6
NUM_NODE_TYPES = 4
LANES = 128          # lane-dense width for the packed parameter slab / output slab


def _align8(n):
    return (n + 7) // 8 * 8


# ----------------------------------------------------------------------------------
# Parameter initialization (deterministic, mirrors DBLPModel.__init__/init_parameter)
# ----------------------------------------------------------------------------------
def xavier_normal(key, shape, gain):
    fan_out, fan_in = shape[0], shape[1]
    std = gain * math.sqrt(2.0 / (fan_in + fan_out))
    return std * jax.random.normal(key, shape, jnp.float32)


def orthogonal(key, shape, gain):
    rows, cols = shape
    n = max(rows, cols)
    a = jax.random.normal(key, (n, n), jnp.float32)
    q, r = jnp.linalg.qr(a)
    sgn = jnp.sign(jnp.diag(r))
    sgn = jnp.where(sgn == 0, 1.0, sgn)
    q = q * sgn[None, :]
    return gain * q[:rows, :cols]


def init_params(key, input_feature_dims, hidden, intra, inter, out_dim, gain):
    keys = iter(jax.random.split(key, 64))
    n_mp = len(METAPATH_LIST)
    p = {}
    # comp_vec: one (1, hidden) per edge type, xavier_normal
    p["comp_vec"] = jnp.stack(
        [xavier_normal(next(keys), (1, hidden), gain) for _ in range(NUM_EDGE_TYPES)])
    # 2 shared GraphConv aggregators (hidden -> hidden)
    # TODO(synk): dgl GraphConv weight init approximated with orthogonal; its zero bias
    # (and all other zero linear biases) is dropped from the kernel entirely.
    p["agg_w"] = jnp.stack([orthogonal(next(keys), (hidden, hidden), 1.0)
                            for _ in range(2)])
    # NodeTransform: per node type Linear(d_t -> hidden), stored as (d_t, hidden)
    p["nt_w"] = [xavier_normal(next(keys), (hidden, d), gain).T
                 for d in input_feature_dims]
    # AutoMvFusion: per-metapath intra projections + shared inter projection (+ reverses)
    p["fc_list"] = jnp.stack([orthogonal(next(keys), (hidden, intra), gain)
                              for _ in range(n_mp)])
    p["fc_list_rev"] = jnp.stack([orthogonal(next(keys), (intra, hidden), gain)
                                  for _ in range(n_mp)])
    p["V"] = orthogonal(next(keys), (n_mp * intra, inter), gain)
    p["V_rev"] = orthogonal(next(keys), (inter, n_mp * intra), gain)
    # output layer Linear(inter -> out_dim); bias left at zero (see TODO above)
    p["out_w"] = xavier_normal(next(keys), (out_dim, inter), gain).T      # (inter, out)
    return p


# ----------------------------------------------------------------------------------
# Packed parameter slab layout (pure layout plumbing, done once outside the jit)
# ----------------------------------------------------------------------------------
def param_layout(hidden, intra, inter, out_dim, n_types, f_pad):
    H, n_mp = hidden, len(METAPATH_LIST)
    assert n_types * H <= LANES              # NodeTransform block-diag output lanes
    assert n_mp * H <= LANES                 # block-diag agg / fc_rev lanes
    assert inter + n_mp * H <= LANES         # V | blkdiag(fc_rev) share rows
    assert 2 * n_mp * intra <= LANES         # V_rev | V^T share rows
    assert out_dim + inter + 1 <= LANES      # output slab: logits | fused | loss
    off, r = {}, 0
    for name, rows in (("nt", n_types * f_pad), ("comp", NUM_EDGE_TYPES),
                       ("agg", H), ("aggbd", n_mp * H), ("fcbd", n_mp * H),
                       ("v", n_mp * intra), ("vr", inter), ("head", inter)):
        off[name] = r
        r += _align8(rows)
    off["rows"] = r
    return off


def pack_params(p, *, hidden, intra, inter, out_dim, n_types, f_pad):
    H, n_mp = hidden, len(METAPATH_LIST)
    off = param_layout(H, intra, inter, out_dim, n_types, f_pad)
    P = jnp.zeros((off["rows"], LANES), jnp.float32)

    # NodeTransform block-diagonal weight (n_types*f_pad, n_types*H)
    for t, w in enumerate(p["nt_w"]):
        d = w.shape[0]
        P = P.at[off["nt"] + t * f_pad: off["nt"] + t * f_pad + d,
                 t * H:(t + 1) * H].set(w)
    # comp vectors: one row per edge type, lanes 0:H
    P = P.at[off["comp"]:off["comp"] + NUM_EDGE_TYPES, 0:H].set(p["comp_vec"][:, 0, :])
    # agg_w[0] | agg_w[1]
    P = P.at[off["agg"]:off["agg"] + H, 0:H].set(p["agg_w"][0])
    P = P.at[off["agg"]:off["agg"] + H, H:2 * H].set(p["agg_w"][1])
    # block-diag of agg_w[0] x3 (lane-batched terminal edge-1 hop)
    for m in range(n_mp):
        P = P.at[off["aggbd"] + m * H: off["aggbd"] + (m + 1) * H,
                 m * H:(m + 1) * H].set(p["agg_w"][0])
    # block-diag fc_list (3H, 3*intra)
    for m in range(n_mp):
        P = P.at[off["fcbd"] + m * H: off["fcbd"] + (m + 1) * H,
                 m * intra:(m + 1) * intra].set(p["fc_list"][m])
    # V (3*intra, inter)  |  block-diag fc_list_rev (3*intra, 3H)   (same rows)
    P = P.at[off["v"]:off["v"] + n_mp * intra, 0:inter].set(p["V"])
    for m in range(n_mp):
        P = P.at[off["v"] + m * intra: off["v"] + (m + 1) * intra,
                 inter + m * H: inter + (m + 1) * H].set(p["fc_list_rev"][m])
    # V_rev (inter, 3*intra)  |  V^T (inter, 3*intra)               (same rows)
    P = P.at[off["vr"]:off["vr"] + inter, 0:n_mp * intra].set(p["V_rev"])
    P = P.at[off["vr"]:off["vr"] + inter,
             n_mp * intra:2 * n_mp * intra].set(p["V"].T)
    # output head (inter, LANES): [out_w | I_inter | 0...] -> one matmul emits the slab
    P = P.at[off["head"]:off["head"] + inter, 0:out_dim].set(p["out_w"])
    P = P.at[off["head"]:off["head"] + inter,
             out_dim:out_dim + inter].set(jnp.eye(inter, dtype=jnp.float32))
    return P


# ----------------------------------------------------------------------------------
# Forward pass: one fused Pallas kernel (mirrors DBLPModel.forward semantics)
# ----------------------------------------------------------------------------------
def dblp_forward(param_pack, feat_cat, adj_pack, *, hidden, intra, inter, out_dim,
                 rows_per_type, n_valid_rows, mse=True):
    """feat_cat:   (R, T*F_PAD)   lane-dense per-type feature slab.
       adj_pack:   (6R, 2R)       packed right-normalized adjacency blocks.
       param_pack: (rows, 128)    packed parameter slab.
       Returns (logits (R, out_dim), fused (R, inter), scalar loss)."""
    R, H, T = rows_per_type, hidden, NUM_NODE_TYPES
    n_mp = len(METAPATH_LIST)
    f_pad = feat_cat.shape[1] // T
    off = param_layout(H, intra, inter, out_dim, T, f_pad)
    assert feat_cat.shape == (R, T * f_pad)
    assert adj_pack.shape == (6 * R, 2 * R)
    assert param_pack.shape == (off["rows"], LANES)

    def kernel(feat_ref, adj_ref, par_ref, out_ref):
        f32 = jnp.float32

        def mm(a, b):                     # a @ b on the MXU, f32 accumulation
            return jnp.dot(a, b, preferred_element_type=f32)

        def mm_t(a, b):                   # a @ b.T (contraction on last dims)
            return lax.dot_general(a, b, (((1,), (1,)), ((), ())),
                                   preferred_element_type=f32)

        # ---- packed parameter views (8-aligned row slices; lane slices on values) ----
        ntw_bd = par_ref[off["nt"]:off["nt"] + T * f_pad, 0:T * H]
        comp_blk = par_ref[off["comp"]:off["comp"] + _align8(NUM_EDGE_TYPES), :]
        c = [comp_blk[e:e + 1, 0:H] for e in range(NUM_EDGE_TYPES)]      # (1, H) each
        agg = par_ref[off["agg"]:off["agg"] + H, :]
        agg_w0, agg_w1 = agg[:, 0:H], agg[:, H:2 * H]
        aggbd3 = par_ref[off["aggbd"]:off["aggbd"] + n_mp * H, 0:n_mp * H]
        fc_bd = par_ref[off["fcbd"]:off["fcbd"] + n_mp * H, 0:n_mp * intra]
        vrow = par_ref[off["v"]:off["v"] + n_mp * intra, :]
        V, fcrev_bd = vrow[:, 0:inter], vrow[:, inter:inter + n_mp * H]
        vrrow = par_ref[off["vr"]:off["vr"] + inter, :]
        V_rev = vrrow[:, 0:n_mp * intra]
        V_T = vrrow[:, n_mp * intra:2 * n_mp * intra]
        w_head = par_ref[off["head"]:off["head"] + inter, :]

        # ---- packed adjacency views ----
        adj01 = adj_ref[0:2 * R, :]
        adj0, adj1 = adj01[0:R, 0:R], adj01[R:2 * R, 0:R]
        adj24 = adj_ref[2 * R:4 * R, :]          # blkdiag(adj2, adj4)
        adj35 = adj_ref[4 * R:6 * R, :]          # blkdiag(adj3, adj5)

        # ---- NodeTransform: all node types in one block-diagonal matmul + ReLU ----
        # TODO(synk): NodeTransform dropout is skipped (eval mode).
        h_cat = jnp.maximum(mm(feat_ref[...], ntw_bd), 0.0)          # (R, T*H)
        h0 = h_cat[:, 0:H]                                           # authors (type 0)

        # ---- EgoGraphEncoding / CompGCN hops ----
        # TODO(synk): exact CompGCNEncoder composition op unknown; a learned
        # per-edge-type elementwise multiply is used (same as previous version).
        # shared first hop, edge 0 (author -> paper), agg_conv[1]
        p = mm(mm(adj0, h0 * c[0]), agg_w1)                          # (R, H)

        # edges 2 & 4 (paper -> term / venue), agg_conv[0]; sublane-batched
        hc24 = jnp.concatenate([p * c[2], p * c[4]], axis=0)         # (2R, H)
        t24 = mm(mm(adj24, hc24), agg_w0)                            # (2R, H) = [t2; t3]

        # edges 3 & 5 (term / venue -> paper), agg_conv[1]; sublane-batched
        hc35 = jnp.concatenate([t24[0:R] * c[3], t24[R:2 * R] * c[5]], axis=0)
        p12 = mm(mm(adj35, hc35), agg_w1)                            # (2R, H) = [p1; p2]

        # terminal hop, edge 1 (paper -> author), agg_conv[0]; lane-batched x3 metapaths
        hc1 = jnp.concatenate([p * c[1], p12[0:R] * c[1], p12[R:2 * R] * c[1]], axis=1)
        mp_cat = mm(mm(adj1, hc1), aggbd3)                           # (R, 3H) = [mp0|mp1|mp2]

        # ---- AutoMvFusion: wide fused contractions + recon / ortho losses ----
        z_cat = mm(mp_cat, fc_bd)                                    # (R, 3*intra)
        fused = mm(z_cat, V)                                         # (R, inter)
        zh = mm(fused, V_rev)                                        # (R, 3*intra)
        recon = mm(zh, fcrev_bd)                                     # (R, 3H)
        diff = recon - mp_cat
        v = diff * diff if mse else jnp.abs(diff)
        # padded author rows contribute 0; divide by the true element count
        re_loss = jnp.sum(v, keepdims=True) / float(n_valid_rows * H)    # (1,1)

        # TODO(synk): orthogonality definition (V^T V / V_rev V_rev^T, /inter^2
        # normalization) unverified against the original AutoMvFusion.
        gram_v = mm_t(V_T, V_T)        # V^T V
        gram_vr = mm_t(V_rev, V_rev)   # V_rev V_rev^T
        ri = lax.broadcasted_iota(jnp.int32, (inter, inter), 0)
        ci = lax.broadcasted_iota(jnp.int32, (inter, inter), 1)
        eye = (ri == ci).astype(f32)
        dv, dvr = gram_v - eye, gram_vr - eye
        ortho = (jnp.sum(dv * dv, keepdims=True)
                 + jnp.sum(dvr * dvr, keepdims=True)) / float(inter * inter)
        loss = re_loss + ortho                                       # (1,1)

        # ---- single lane-dense output slab: [logits | fused | loss | 0...] ----
        head = mm(fused, w_head)                                     # (R, LANES)
        lane = lax.broadcasted_iota(jnp.int32, (1, LANES), 1)
        loss_lane = (lane == (out_dim + inter)).astype(f32)          # (1, LANES)
        out_ref[...] = head + loss_lane * loss

    vmem = pl.BlockSpec(memory_space=pltpu.MemorySpace.VMEM)
    slab = pl.pallas_call(
        kernel,
        out_shape=jax.ShapeDtypeStruct((R, LANES), jnp.float32),
        in_specs=[vmem, vmem, vmem],
        out_specs=vmem,
    )(feat_cat, adj_pack, param_pack)

    logits = slab[:, :out_dim]
    fused = slab[:, out_dim:out_dim + inter]
    loss = slab[0, out_dim + inter]
    return logits, fused, loss


# ----------------------------------------------------------------------------------
# Synthetic graph / feature construction (padded, packed for the kernel)
# ----------------------------------------------------------------------------------
def build_inputs(key, type_counts, input_feature_dims, rows_per_type, f_pad):
    R = rows_per_type
    keys = jax.random.split(key, 16)

    feats_pad = []
    for t, (cnt, d) in enumerate(zip(type_counts, input_feature_dims)):
        x = jax.random.normal(keys[t], (cnt, d), jnp.float32)
        feats_pad.append(jnp.pad(x, ((0, R - cnt), (0, f_pad - d))))
    feat_cat = jnp.concatenate(feats_pad, axis=1)                    # (R, T*f_pad)

    adj_blocks = []
    for e in range(NUM_EDGE_TYPES):
        s_t, d_t = EDGE_SRC_DST[e]
        mask = jax.random.bernoulli(
            keys[8 + e], p=0.3,
            shape=(type_counts[d_t], type_counts[s_t])).astype(jnp.float32)
        deg = jnp.clip(jnp.sum(mask, axis=1, keepdims=True), 1.0, None)   # right norm
        adj_blocks.append(jnp.pad(mask / deg, ((0, R - type_counts[d_t]),
                                               (0, R - type_counts[s_t]))))

    # packed: rows 0:R adj0, R:2R adj1 (lanes 0:R); 2R:4R blkdiag(adj2, adj4);
    #         4R:6R blkdiag(adj3, adj5)
    adj_pack = jnp.zeros((6 * R, 2 * R), jnp.float32)
    adj_pack = adj_pack.at[0:R, 0:R].set(adj_blocks[0])
    adj_pack = adj_pack.at[R:2 * R, 0:R].set(adj_blocks[1])
    adj_pack = adj_pack.at[2 * R:3 * R, 0:R].set(adj_blocks[2])
    adj_pack = adj_pack.at[3 * R:4 * R, R:2 * R].set(adj_blocks[4])
    adj_pack = adj_pack.at[4 * R:5 * R, 0:R].set(adj_blocks[3])
    adj_pack = adj_pack.at[5 * R:6 * R, R:2 * R].set(adj_blocks[5])
    return feat_cat, adj_pack, feats_pad, adj_blocks


# ----------------------------------------------------------------------------------
# Pure-JAX reference (unbatched, straightforward) for a correctness check
# ----------------------------------------------------------------------------------
def reference_forward(params, feats_pad, adj_blocks, *, hidden, intra, inter,
                      out_dim, n_valid, mse):
    H = hidden
    dot = functools.partial(jnp.dot, precision=lax.Precision.HIGHEST)

    def hop(x, e):
        a = 0 if e in (1, 2, 4) else 1
        return dot(dot(adj_blocks[e], x * params["comp_vec"][e]), params["agg_w"][a])

    h = [jnp.maximum(dot(feats_pad[t][:, :w.shape[0]], w), 0.0)
         for t, w in enumerate(params["nt_w"])]
    p = hop(h[0], 0)
    mp = []
    for etypes in EDGE_TYPE_LIST:
        x = p
        for e in etypes[1:]:
            x = hop(x, e)
        mp.append(x)

    z_cat = jnp.concatenate([dot(mp[m], params["fc_list"][m]) for m in range(3)], axis=1)
    fused = dot(z_cat, params["V"])
    zh = dot(fused, params["V_rev"])
    re_loss = 0.0
    for m in range(3):
        recon = dot(zh[:, m * intra:(m + 1) * intra], params["fc_list_rev"][m])
        diff = recon - mp[m]
        v = diff * diff if mse else jnp.abs(diff)
        re_loss = re_loss + jnp.sum(v) / (n_valid * H)
    eye = jnp.eye(inter, dtype=jnp.float32)
    gv = dot(params["V"].T, params["V"]) - eye
    gvr = dot(params["V_rev"], params["V_rev"].T) - eye
    ortho = (jnp.sum(gv * gv) + jnp.sum(gvr * gvr)) / (inter * inter)
    logits = dot(fused, params["out_w"])
    return logits, fused, re_loss + ortho


# ----------------------------------------------------------------------------------
if __name__ == "__main__":
    # args equivalent
    hidden_dim, intra_dim, inter_dim, output_dim = 32, 16, 24, 4
    gain, mse = 1.414, True
    type_counts = [16, 16, 16, 8]                 # authors, papers, terms, venues
    input_feature_dims = [16, 24, 20, 12]
    ROWS_PER_TYPE = 16                            # >= max type count, multiple of 8
    F_PAD = 32                                    # per-type raw feature pad (max dim 24)
    assert max(input_feature_dims) <= F_PAD
    assert max(type_counts) <= ROWS_PER_TYPE and ROWS_PER_TYPE % 8 == 0

    key = jax.random.PRNGKey(0)
    k_param, k_data = jax.random.split(key)

    params = init_params(k_param, input_feature_dims, hidden_dim, intra_dim,
                         inter_dim, output_dim, gain)
    param_pack = pack_params(params, hidden=hidden_dim, intra=intra_dim,
                             inter=inter_dim, out_dim=output_dim,
                             n_types=NUM_NODE_TYPES, f_pad=F_PAD)
    feat_cat, adj_pack, feats_pad, adj_blocks = build_inputs(
        k_data, type_counts, input_feature_dims, ROWS_PER_TYPE, F_PAD)

    fwd = jax.jit(functools.partial(
        dblp_forward, hidden=hidden_dim, intra=intra_dim, inter=inter_dim,
        out_dim=output_dim, rows_per_type=ROWS_PER_TYPE,
        n_valid_rows=type_counts[0], mse=mse))

    logits, fused, loss = fwd(param_pack, feat_cat, adj_pack)
    jax.block_until_ready((logits, fused, loss))

    n_a = type_counts[0]
    logits_a, fused_a = logits[:n_a], fused[:n_a]
    assert logits_a.shape == (n_a, output_dim)
    assert fused_a.shape == (n_a, inter_dim)
    assert loss.shape == ()
    assert bool(jnp.all(jnp.isfinite(logits_a))) and bool(jnp.isfinite(loss))

    # correctness check against a straightforward pure-JAX reference
    ref_logits, ref_fused, ref_loss = reference_forward(
        params, feats_pad, adj_blocks, hidden=hidden_dim, intra=intra_dim,
        inter=inter_dim, out_dim=output_dim, n_valid=n_a, mse=mse)

    def rel_err(a, b):
        return float(jnp.linalg.norm(a - b) / (jnp.linalg.norm(b) + 1e-6))

    assert rel_err(logits_a, ref_logits[:n_a]) < 2e-2
    assert rel_err(fused_a, ref_fused[:n_a]) < 2e-2
    assert abs(float(loss) - float(ref_loss)) / (abs(float(ref_loss)) + 1e-6) < 2e-2

    print("KERNEL_OK")
</pallas_src>

<mosaic_0001>
module attributes {stable_mosaic.version = 11 : i64} {
  func.func @kernel(%arg0: memref<16x128xf32, #tpu.memory_space<vmem>>, %arg1: memref<96x32xf32, #tpu.memory_space<vmem>>, %arg2: memref<456x128xf32, #tpu.memory_space<vmem>>, %arg3: memref<16x128xf32, #tpu.memory_space<vmem>>) attributes {dimension_semantics = [], scalar_prefetch = 0 : i64, scratch_operands = 0 : i64, tpu.core_type = #tpu.core_type<tc>} {
    %c0 = arith.constant 0 : index
    %c0_0 = arith.constant 0 : index
    %0 = vector.load %arg2[%c0, %c0_0] : memref<456x128xf32, #tpu.memory_space<vmem>>, vector<128x128xf32>
    %c128 = arith.constant 128 : index
    %c0_1 = arith.constant 0 : index
    %1 = vector.load %arg2[%c128, %c0_1] : memref<456x128xf32, #tpu.memory_space<vmem>>, vector<8x128xf32>
    %2 = vector.extract_strided_slice %1 {offsets = [0, 0], sizes = [1, 32], strides = [1, 1]} : vector<8x128xf32> to vector<1x32xf32>
    %3 = vector.extract_strided_slice %1 {offsets = [1, 0], sizes = [1, 32], strides = [1, 1]} : vector<8x128xf32> to vector<1x32xf32>
    %4 = vector.extract_strided_slice %1 {offsets = [2, 0], sizes = [1, 32], strides = [1, 1]} : vector<8x128xf32> to vector<1x32xf32>
    %5 = vector.extract_strided_slice %1 {offsets = [3, 0], sizes = [1, 32], strides = [1, 1]} : vector<8x128xf32> to vector<1x32xf32>
    %6 = vector.extract_strided_slice %1 {offsets = [4, 0], sizes = [1, 32], strides = [1, 1]} : vector<8x128xf32> to vector<1x32xf32>
    %7 = vector.extract_strided_slice %1 {offsets = [5, 0], sizes = [1, 32], strides = [1, 1]} : vector<8x128xf32> to vector<1x32xf32>
    %c136 = arith.constant 136 : index
    %c0_2 = arith.constant 0 : index
    %8 = vector.load %arg2[%c136, %c0_2] : memref<456x128xf32, #tpu.memory_space<vmem>>, vector<32x128xf32>
    %9 = vector.extract_strided_slice %8 {offsets = [0, 0], sizes = [32, 32], strides = [1, 1]} : vector<32x128xf32> to vector<32x32xf32>
    %10 = vector.extract_strided_slice %8 {offsets = [0, 32], sizes = [32, 32], strides = [1, 1]} : vector<32x128xf32> to vector<32x32xf32>
    %c168 = arith.constant 168 : index
    %c0_3 = arith.constant 0 : index
    %11 = vector.load %arg2[%c168, %c0_3] : memref<456x128xf32, #tpu.memory_space<vmem>>, vector<96x96xf32>
    %c264 = arith.constant 264 : index
    %c0_4 = arith.constant 0 : index
    %12 = vector.load %arg2[%c264, %c0_4] : memref<456x128xf32, #tpu.memory_space<vmem>>, vector<96x48xf32>
    %c360 = arith.constant 360 : index
    %c0_5 = arith.constant 0 : index
    %13 = vector.load %arg2[%c360, %c0_5] : memref<456x128xf32, #tpu.memory_space<vmem>>, vector<48x128xf32>
    %14 = vector.extract_strided_slice %13 {offsets = [0, 0], sizes = [48, 24], strides = [1, 1]} : vector<48x128xf32> to vector<48x24xf32>
    %15 = vector.extract_strided_slice %13 {offsets = [0, 24], sizes = [48, 96], strides = [1, 1]} : vector<48x128xf32> to vector<48x96xf32>
    %c408 = arith.constant 408 : index
    %c0_6 = arith.constant 0 : index
    %16 = vector.load %arg2[%c408, %c0_6] : memref<456x128xf32, #tpu.memory_space<vmem>>, vector<24x128xf32>
    %17 = vector.extract_strided_slice %16 {offsets = [0, 0], sizes = [24, 48], strides = [1, 1]} : vector<24x128xf32> to vector<24x48xf32>
    %18 = vector.extract_strided_slice %16 {offsets = [0, 48], sizes = [24, 48], strides = [1, 1]} : vector<24x128xf32> to vector<24x48xf32>
    %c432 = arith.constant 432 : index
    %c0_7 = arith.constant 0 : index
    %19 = vector.load %arg2[%c432, %c0_7] : memref<456x128xf32, #tpu.memory_space<vmem>>, vector<24x128xf32>
    %c0_8 = arith.constant 0 : index
    %c0_9 = arith.constant 0 : index
    %20 = vector.load %arg1[%c0_8, %c0_9] : memref<96x32xf32, #tpu.memory_space<vmem>>, vector<32x32xf32>
    %21 = vector.extract_strided_slice %20 {offsets = [0, 0], sizes = [16, 16], strides = [1, 1]} : vector<32x32xf32> to vector<16x16xf32>
    %22 = vector.extract_strided_slice %20 {offsets = [16, 0], sizes = [16, 16], strides = [1, 1]} : vector<32x32xf32> to vector<16x16xf32>
    %c32 = arith.constant 32 : index
    %c0_10 = arith.constant 0 : index
    %23 = vector.load %arg1[%c32, %c0_10] : memref<96x32xf32, #tpu.memory_space<vmem>>, vector<32x32xf32>
    %c64 = arith.constant 64 : index
    %c0_11 = arith.constant 0 : index
    %24 = vector.load %arg1[%c64, %c0_11] : memref<96x32xf32, #tpu.memory_space<vmem>>, vector<32x32xf32>
    %c0_12 = arith.constant 0 : index
    %c0_13 = arith.constant 0 : index
    %25 = vector.load %arg0[%c0_12, %c0_13] : memref<16x128xf32, #tpu.memory_space<vmem>>, vector<16x128xf32>
    %cst = arith.constant dense<0.000000e+00> : vector<16x128xf32>
    %26 = tpu.matmul %25, %0, %cst {dimension_numbers = #tpu.dot_dimension_numbers<[1], [0], [0], [1], [0, 0, 1, 1], [], []>} : vector<16x128xf32>, vector<128x128xf32>, vector<16x128xf32> -> vector<16x128xf32>
    %cst_14 = arith.constant 0.000000e+00 : f32
    %27 = vector.broadcast %cst_14 : f32 to vector<16x128xf32>
    %28 = arith.maximumf %26, %27 : vector<16x128xf32>
    %29 = vector.extract_strided_slice %28 {offsets = [0, 0], sizes = [16, 32], strides = [1, 1]} : vector<16x128xf32> to vector<16x32xf32>
    %30 = vector.broadcast %2 : vector<1x32xf32> to vector<16x32xf32>
    %31 = arith.mulf %29, %30 : vector<16x32xf32>
    %cst_15 = arith.constant dense<0.000000e+00> : vector<16x32xf32>
    %32 = tpu.matmul %21, %31, %cst_15 {dimension_numbers = #tpu.dot_dimension_numbers<[1], [0], [0], [1], [0, 0, 1, 1], [], []>} : vector<16x16xf32>, vector<16x32xf32>, vector<16x32xf32> -> vector<16x32xf32>
    %cst_16 = arith.constant dense<0.000000e+00> : vector<16x32xf32>
    %33 = tpu.matmul %32, %10, %cst_16 {dimension_numbers = #tpu.dot_dimension_numbers<[1], [0], [0], [1], [0, 0, 1, 1], [], []>} : vector<16x32xf32>, vector<32x32xf32>, vector<16x32xf32> -> vector<16x32xf32>
    %34 = vector.broadcast %4 : vector<1x32xf32> to vector<16x32xf32>
    %35 = arith.mulf %33, %34 : vector<16x32xf32>
    %36 = vector.broadcast %6 : vector<1x32xf32> to vector<16x32xf32>
    %37 = arith.mulf %33, %36 : vector<16x32xf32>
    %38 = tpu.concatenate %35, %37 in 0 : vector<16x32xf32>, vector<16x32xf32> -> vector<32x32xf32>
    %cst_17 = arith.constant dense<0.000000e+00> : vector<32x32xf32>
    %39 = tpu.matmul %23, %38, %cst_17 {dimension_numbers = #tpu.dot_dimension_numbers<[1], [0], [0], [1], [0, 0, 1, 1], [], []>} : vector<32x32xf32>, vector<32x32xf32>, vector<32x32xf32> -> vector<32x32xf32>
    %cst_18 = arith.constant dense<0.000000e+00> : vector<32x32xf32>
    %40 = tpu.matmul %39, %9, %cst_18 {dimension_numbers = #tpu.dot_dimension_numbers<[1], [0], [0], [1], [0, 0, 1, 1], [], []>} : vector<32x32xf32>, vector<32x32xf32>, vector<32x32xf32> -> vector<32x32xf32>
    %41 = vector.extract_strided_slice %40 {offsets = [0, 0], sizes = [16, 32], strides = [1, 1]} : vector<32x32xf32> to vector<16x32xf32>
    %42 = vector.broadcast %5 : vector<1x32xf32> to vector<16x32xf32>
    %43 = arith.mulf %41, %42 : vector<16x32xf32>
    %44 = vector.extract_strided_slice %40 {offsets = [16, 0], sizes = [16, 32], strides = [1, 1]} : vector<32x32xf32> to vector<16x32xf32>
    %45 = vector.broadcast %7 : vector<1x32xf32> to vector<16x32xf32>
    %46 = arith.mulf %44, %45 : vector<16x32xf32>
    %47 = tpu.concatenate %43, %46 in 0 : vector<16x32xf32>, vector<16x32xf32> -> vector<32x32xf32>
    %cst_19 = arith.constant dense<0.000000e+00> : vector<32x32xf32>
    %48 = tpu.matmul %24, %47, %cst_19 {dimension_numbers = #tpu.dot_dimension_numbers<[1], [0], [0], [1], [0, 0, 1, 1], [], []>} : vector<32x32xf32>, vector<32x32xf32>, vector<32x32xf32> -> vector<32x32xf32>
    %cst_20 = arith.constant dense<0.000000e+00> : vector<32x32xf32>
    %49 = tpu.matmul %48, %10, %cst_20 {dimension_numbers = #tpu.dot_dimension_numbers<[1], [0], [0], [1], [0, 0, 1, 1], [], []>} : vector<32x32xf32>, vector<32x32xf32>, vector<32x32xf32> -> vector<32x32xf32>
    %50 = vector.broadcast %3 : vector<1x32xf32> to vector<16x32xf32>
    %51 = arith.mulf %33, %50 : vector<16x32xf32>
    %52 = vector.extract_strided_slice %49 {offsets = [0, 0], sizes = [16, 32], strides = [1, 1]} : vector<32x32xf32> to vector<16x32xf32>
    %53 = vector.broadcast %3 : vector<1x32xf32> to vector<16x32xf32>
    %54 = arith.mulf %52, %53 : vector<16x32xf32>
    %55 = vector.extract_strided_slice %49 {offsets = [16, 0], sizes = [16, 32], strides = [1, 1]} : vector<32x32xf32> to vector<16x32xf32>
    %56 = vector.broadcast %3 : vector<1x32xf32> to vector<16x32xf32>
    %57 = arith.mulf %55, %56 : vector<16x32xf32>
    %58 = tpu.concatenate %51, %54, %57 in 1 : vector<16x32xf32>, vector<16x32xf32>, vector<16x32xf32> -> vector<16x96xf32>
    %cst_21 = arith.constant dense<0.000000e+00> : vector<16x96xf32>
    %59 = tpu.matmul %22, %58, %cst_21 {dimension_numbers = #tpu.dot_dimension_numbers<[1], [0], [0], [1], [0, 0, 1, 1], [], []>} : vector<16x16xf32>, vector<16x96xf32>, vector<16x96xf32> -> vector<16x96xf32>
    %cst_22 = arith.constant dense<0.000000e+00> : vector<16x96xf32>
    %60 = tpu.matmul %59, %11, %cst_22 {dimension_numbers = #tpu.dot_dimension_numbers<[1], [0], [0], [1], [0, 0, 1, 1], [], []>} : vector<16x96xf32>, vector<96x96xf32>, vector<16x96xf32> -> vector<16x96xf32>
    %cst_23 = arith.constant dense<0.000000e+00> : vector<16x48xf32>
    %61 = tpu.matmul %60, %12, %cst_23 {dimension_numbers = #tpu.dot_dimension_numbers<[1], [0], [0], [1], [0, 0, 1, 1], [], []>} : vector<16x96xf32>, vector<96x48xf32>, vector<16x48xf32> -> vector<16x48xf32>
    %cst_24 = arith.constant dense<0.000000e+00> : vector<16x24xf32>
    %62 = tpu.matmul %61, %14, %cst_24 {dimension_numbers = #tpu.dot_dimension_numbers<[1], [0], [0], [1], [0, 0, 1, 1], [], []>} : vector<16x48xf32>, vector<48x24xf32>, vector<16x24xf32> -> vector<16x24xf32>
    %cst_25 = arith.constant dense<0.000000e+00> : vector<16x48xf32>
    %63 = tpu.matmul %62, %17, %cst_25 {dimension_numbers = #tpu.dot_dimension_numbers<[1], [0], [0], [1], [0, 0, 1, 1], [], []>} : vector<16x24xf32>, vector<24x48xf32>, vector<16x48xf32> -> vector<16x48xf32>
    %cst_26 = arith.constant dense<0.000000e+00> : vector<16x96xf32>
    %64 = tpu.matmul %63, %15, %cst_26 {dimension_numbers = #tpu.dot_dimension_numbers<[1], [0], [0], [1], [0, 0, 1, 1], [], []>} : vector<16x48xf32>, vector<48x96xf32>, vector<16x96xf32> -> vector<16x96xf32>
    %65 = arith.subf %64, %60 : vector<16x96xf32>
    %66 = arith.mulf %65, %65 : vector<16x96xf32>
    %67 = vector.shape_cast %66 : vector<16x96xf32> to vector<1x16x96xf32>
    %cst_27 = arith.constant dense<0.000000e+00> : vector<1xf32>
    %68 = vector.multi_reduction <add>, %67, %cst_27 [1, 2] : vector<1x16x96xf32> to vector<1xf32>
    %69 = vector.shape_cast %68 : vector<1xf32> to vector<1x1x1xf32>
    %70 = vector.extract %69[0, 0, 0] : f32 from vector<1x1x1xf32>
    %71 = vector.broadcast %70 : f32 to vector<1x1xf32>
    %cst_28 = arith.constant 5.120000e+02 : f32
    %72 = vector.broadcast %cst_28 : f32 to vector<1x1xf32>
    %73 = arith.divf %71, %72 : vector<1x1xf32>
    %cst_29 = arith.constant dense<0.000000e+00> : vector<24x24xf32>
    %74 = tpu.matmul %18, %18, %cst_29 {dimension_numbers = #tpu.dot_dimension_numbers<[1], [1], [0], [0], [0, 0, 1, 0], [], []>} : vector<24x48xf32>, vector<24x48xf32>, vector<24x24xf32> -> vector<24x24xf32>
    %cst_30 = arith.constant dense<0.000000e+00> : vector<24x24xf32>
    %75 = tpu.matmul %17, %17, %cst_30 {dimension_numbers = #tpu.dot_dimension_numbers<[1], [1], [0], [0], [0, 0, 1, 0], [], []>} : vector<24x48xf32>, vector<24x48xf32>, vector<24x24xf32> -> vector<24x24xf32>
    %76 = tpu.iota {dimensions = array<i32: 0>} : vector<24x24xi32>
    %77 = tpu.iota {dimensions = array<i32: 1>} : vector<24x24xi32>
    %78 = arith.cmpi eq, %76, %77 : vector<24x24xi32>
    %79 = arith.extui %78 : vector<24x24xi1> to vector<24x24xi32>
    %80 = arith.sitofp %79 : vector<24x24xi32> to vector<24x24xf32>
    %81 = arith.subf %74, %80 : vector<24x24xf32>
    %82 = arith.subf %75, %80 : vector<24x24xf32>
    %83 = arith.mulf %81, %81 : vector<24x24xf32>
    %84 = vector.shape_cast %83 : vector<24x24xf32> to vector<1x24x24xf32>
    %cst_31 = arith.constant dense<0.000000e+00> : vector<1xf32>
    %85 = vector.multi_reduction <add>, %84, %cst_31 [1, 2] : vector<1x24x24xf32> to vector<1xf32>
    %86 = vector.shape_cast %85 : vector<1xf32> to vector<1x1x1xf32>
    %87 = vector.extract %86[0, 0, 0] : f32 from vector<1x1x1xf32>
    %88 = vector.broadcast %87 : f32 to vector<1x1xf32>
    %89 = arith.mulf %82, %82 : vector<24x24xf32>
    %90 = vector.shape_cast %89 : vector<24x24xf32> to vector<1x24x24xf32>
    %cst_32 = arith.constant dense<0.000000e+00> : vector<1xf32>
    %91 = vector.multi_reduction <add>, %90, %cst_32 [1, 2] : vector<1x24x24xf32> to vector<1xf32>
    %92 = vector.shape_cast %91 : vector<1xf32> to vector<1x1x1xf32>
    %93 = vector.extract %92[0, 0, 0] : f32 from vector<1x1x1xf32>
    %94 = vector.broadcast %93 : f32 to vector<1x1xf32>
    %95 = arith.addf %88, %94 : vector<1x1xf32>
    %cst_33 = arith.constant 5.760000e+02 : f32
    %96 = vector.broadcast %cst_33 : f32 to vector<1x1xf32>
    %97 = arith.divf %95, %96 : vector<1x1xf32>
    %98 = arith.addf %73, %97 : vector<1x1xf32>
    %cst_34 = arith.constant dense<0.000000e+00> : vector<16x128xf32>
    %99 = tpu.matmul %62, %19, %cst_34 {dimension_numbers = #tpu.dot_dimension_numbers<[1], [0], [0], [1], [0, 0, 1, 1], [], []>} : vector<16x24xf32>, vector<24x128xf32>, vector<16x128xf32> -> vector<16x128xf32>
    %100 = tpu.iota {dimensions = array<i32: 1>} : vector<1x128xi32>
    %c28_i32 = arith.constant 28 : i32
    %101 = vector.broadcast %c28_i32 : i32 to vector<1x128xi32>
    %102 = arith.cmpi eq, %100, %101 : vector<1x128xi32>
    %103 = arith.extui %102 : vector<1x128xi1> to vector<1x128xi32>
    %104 = arith.sitofp %103 : vector<1x128xi32> to vector<1x128xf32>
    %105 = vector.broadcast %98 : vector<1x1xf32> to vector<1x128xf32>
    %106 = arith.mulf %104, %105 : vector<1x128xf32>
    %107 = vector.broadcast %106 : vector<1x128xf32> to vector<16x128xf32>
    %108 = arith.addf %99, %107 : vector<16x128xf32>
    %c0_35 = arith.constant 0 : index
    %c0_36 = arith.constant 0 : index
    %109 = vector.load %arg3[%c0_35, %c0_36] : memref<16x128xf32, #tpu.memory_space<vmem>>, vector<16x128xf32>
    tpu.vector_store %arg3[%c0_35, %c0_36], %108 {strides = array<i32>} : memref<16x128xf32, #tpu.memory_space<vmem>>, vector<16x128xf32>,
    return
  }
}

</mosaic_0001>

<llo_original>
// kernel: dblp_forward.1
$region0: #{dblp_forward.1}
  #allocation0 [shape = 'u32[]', space=smem, size = 0x4, offset = 0x4, fixed_abs, tag = 'smem constant byte address 0x4 - core index']
  #allocation1 [shape = 'u32[72,128]{1,0:T(1,128)}', space=vmem, size = 0x9000, scoped, tag = 'internal scratch']
  %s0 = inlined_call_operand.vmem [shape: f32[16,128], index: 0, kind: input, shape index: {}]
  %s1 = inlined_call_operand.vmem [shape: f32[96,32], index: 1, kind: input, shape index: {}]
  %s2 = inlined_call_operand.hbm [shape: f32[456,128], index: 2, kind: input, shape index: {}]
  %s3 = inlined_call_operand.vmem [shape: f32[16,128], index: 3, kind: output, shape index: {}]
  %s4 = sld [smem:[#allocation0]]
  $region26: #{dblp_forward.1} parent=0
    _
  %s6 = ssub.s32 1, %s4
  %s7 = scalar_select 0, %s6, %s4
  $region1: #{dblp_forward.1} parent=0
    #allocation2 [shape = 'u8[233472]{0}', space=vmem, size = 0x39000, scoped, tag = 'input window, operand 2, single buffered']
    #allocation3 [shape = 's32[1]{0}', space=sflag, size = 0x4, scoped, tag = 'scoped memory for dblp_forward.1']
    %8 = vsyncpa [#allocation3], 0
    // Predicated region
    $region2: #{dblp_forward.1} parent=1 // pred_check
      _
    $region3: #{dblp_forward.1} parent=1 // pred_check_branch
      %10 = sbr.rel (0) target = $region5
    $region4: #{dblp_forward.1} parent=1 // pred_region
      _
    $region5: #{dblp_forward.1} parent=1 // pred_fallthru
      _
    // Predicated region
    $region6: #{dblp_forward.1} parent=1 // pred_check
      _
    $region7: #{dblp_forward.1} parent=1 // pred_check_branch
      %12 = sbr.rel (0) target = $region9
    $region8: #{dblp_forward.1} parent=1 // pred_region
      _
    $region9: #{dblp_forward.1} parent=1 // pred_fallthru
      _
    // Predicated region
    $region10: #{dblp_forward.1} parent=1 // pred_check
      _
    $region11: #{dblp_forward.1} parent=1 // pred_check_branch
      %14 = sbr.rel (0) target = $region13
    $region12: #{dblp_forward.1} parent=1 // pred_region
      %16 = vsyncadd [#allocation3], 0
      %s17 = sshll.u32 %s2, 4
      %s18 = int_to_ptr.hbm [resolvable:$true] %s17
      %s19 = sshll.u32 [#allocation2], 4
      %s20 = int_to_ptr.vmem [resolvable:$true] %s19
      %25 = dma.hbm_to_vmem [thread:$0]  %s18, 7296, %s20, [#allocation3], 128, 128, 8
    $region13: #{dblp_forward.1} parent=1 // pred_fallthru
      _
    // Predicated region
    $region14: #{dblp_forward.1} parent=1 // pred_check
      _
    $region15: #{dblp_forward.1} parent=1 // pred_check_branch
      %27 = sbr.rel (0) target = $region17
    $region16: #{dblp_forward.1} parent=1 // pred_region
      %29 = dma.done [#allocation3], 7296
    $region17: #{dblp_forward.1} parent=1 // pred_fallthru
      _
    %v30 = vld [vmem:[#allocation2] sm:$0xff]
    %v31 = vld [vmem:[#allocation2 + $0x8] sm:$0xff]
    %v32 = vld [vmem:[#allocation2 + $0x10] sm:$0xff]
    %v33 = vld [vmem:[#allocation2 + $0x18] sm:$0xff]
    %v34 = vld [vmem:[#allocation2 + $0x20] sm:$0xff]
    %v35 = vld [vmem:[#allocation2 + $0x28] sm:$0xff]
    %v36 = vld [vmem:[#allocation2 + $0x30] sm:$0xff]
    %v37 = vld [vmem:[#allocation2 + $0x38] sm:$0xff]
    %v38 = vld [vmem:[#allocation2 + $0x40] sm:$0xff]
    %v39 = vld [vmem:[#allocation2 + $0x48] sm:$0xff]
    %v40 = vld [vmem:[#allocation2 + $0x50] sm:$0xff]
    %v41 = vld [vmem:[#allocation2 + $0x58] sm:$0xff]
    %v42 = vld [vmem:[#allocation2 + $0x60] sm:$0xff]
    %v43 = vld [vmem:[#allocation2 + $0x68] sm:$0xff]
    %v44 = vld [vmem:[#allocation2 + $0x70] sm:$0xff]
    %v45 = vld [vmem:[#allocation2 + $0x78] sm:$0xff]
    %v46 = vld [vmem:[#allocation2 + $0x80] sm:$0xff]
    %v47 = vld [vmem:[#allocation2 + $0x88] sm:$0xff]
    %v48 = vld [vmem:[#allocation2 + $0x90] sm:$0xff]
    %v49 = vld [vmem:[#allocation2 + $0x98] sm:$0xff]
    %v50 = vld [vmem:[#allocation2 + $0xa0] sm:$0xff]
    %v51 = vld [vmem:[#allocation2 + $0xa8] sm:$0xff]
    %v52 = vld [vmem:[#allocation2 + $0xb0] sm:$0xff]
    %v53 = vld [vmem:[#allocation2 + $0xb8] sm:$0xff]
    %v54 = vld [vmem:[#allocation2 + $0xc0] sm:$0xff]
    %v55 = vld [vmem:[#allocation2 + $0xc8] sm:$0xff]
    %v56 = vld [vmem:[#allocation2 + $0xd0] sm:$0xff]
    %v57 = vld [vmem:[#allocation2 + $0xd8] sm:$0xff]
    %v58 = vld [vmem:[#allocation2 + $0xe0] sm:$0xff]
    %v59 = vld [vmem:[#allocation2 + $0xe8] sm:$0xff]
    %v60 = vld [vmem:[#allocation2 + $0xf0] sm:$0xff]
    %v61 = vld [vmem:[#allocation2 + $0xf8] sm:$0xff]
    %v62 = vld [vmem:[#allocation2 + $0x100] sm:$0xff]
    %v63 = vld [vmem:[#allocation2 + $0x108] sm:$0xff]
    %v64 = vld [vmem:[#allocation2 + $0x110] sm:$0xff]
    %v65 = vld [vmem:[#allocation2 + $0x118] sm:$0xff]
    %v66 = vld [vmem:[#allocation2 + $0x120] sm:$0xff]
    %v67 = vld [vmem:[#allocation2 + $0x128] sm:$0xff]
    %v68 = vld [vmem:[#allocation2 + $0x130] sm:$0xff]
    %v69 = vld [vmem:[#allocation2 + $0x138] sm:$0xff]
    %v70 = vld [vmem:[#allocation2 + $0x140] sm:$0xff]
    %v71 = vld [vmem:[#allocation2 + $0x148] sm:$0xff]
    %v72 = vld [vmem:[#allocation2 + $0x150] sm:$0xff]
    %v73 = vld [vmem:[#allocation2 + $0x158] sm:$0xff]
    %v74 = vld [vmem:[#allocation2 + $0x160] sm:$0xff]
    %v75 = vld [vmem:[#allocation2 + $0x168] sm:$0xff]
    %v76 = vld [vmem:[#allocation2 + $0x170] sm:$0xff]
    %v77 = vld [vmem:[#allocation2 + $0x178] sm:$0xff]
    %v78 = vld [vmem:[#allocation2 + $0x180] sm:$0xff]
    %v79 = vld [vmem:[#allocation2 + $0x188] sm:$0xff]
    %v80 = vld [vmem:[#allocation2 + $0x190] sm:$0xff]
    %v81 = vld [vmem:[#allocation2 + $0x198] sm:$0xff]
    %v82 = vld [vmem:[#allocation2 + $0x1a0] sm:$0xff]
    %v83 = vld [vmem:[#allocation2 + $0x1a8] sm:$0xff]
    %v84 = vld [vmem:[#allocation2 + $0x1b0] sm:$0xff]
    %v85 = vld [vmem:[#allocation2 + $0x1b8] sm:$0xff]
    %v86 = vld [vmem:[#allocation2 + $0x1c0] sm:$0xff]
    %v87 = vld [vmem:[%s1] sm:$0xff]
    %v88 = vld [vmem:[%s1 + $0x8] sm:$0xff]
    %v89 = vld [vmem:[%s1 + $0x10] sm:$0xff]
    %v90 = vld [vmem:[%s1 + $0x18] sm:$0xff]
    %v91 = vld [vmem:[%s1 + $0x20] sm:$0xff]
    %v92 = vld [vmem:[%s1 + $0x28] sm:$0xff]
    %v93 = vld [vmem:[%s1 + $0x30] sm:$0xff]
    %v94 = vld [vmem:[%s1 + $0x38] sm:$0xff]
    %v95 = vld [vmem:[%s1 + $0x40] sm:$0xff]
    %v96 = vld [vmem:[%s1 + $0x48] sm:$0xff]
    %v97 = vld [vmem:[%s1 + $0x50] sm:$0xff]
    %v98 = vld [vmem:[%s1 + $0x58] sm:$0xff]
    %v99 = vld [vmem:[%s0] sm:$0xff]
    %v100 = vld [vmem:[%s0 + $0x8] sm:$0xff]
    %101 = vmatpush.msra.mxu0 %v45
    %102 = vmatpush.msra.mxu0 %v44
    %103 = vmatpush.msra.mxu0 %v43
    %104 = vmatpush.msra.mxu0 %v42
    %105 = vmatpush.msra.mxu0 %v41
    %106 = vmatpush.msra.mxu0 %v40
    %107 = vmatpush.msra.mxu0 %v39
    %108 = vmatpush.msra.mxu0 %v38
    %109 = vmatpush.msra.mxu0 %v37
    %110 = vmatpush.msra.mxu0 %v36
    %111 = vmatpush.msra.mxu0 %v35
    %112 = vmatpush.msra.mxu0 %v34
    %113 = vmatpush.msra.mxu0 %v33
    %114 = vmatpush.msra.mxu0 %v32
    %115 = vmatpush.msra.mxu0 %v31
    %116 = vmatpush.msra.mxu0 %v30
    %117 = vmatmul.f32.gmra.mxu0 %v99
    %v118 = vpop.f32.mrf.mxu0
    %v119 = vadd.f32 0.0, %v118
    %120 = vmatmul.f32.gmra.mxu0 %v100
    %v121 = vpop.f32.mrf.mxu0
    %v122 = vadd.f32 0.0, %v121
    %123 = vdwg.mxu0
    %v124 = vmax.f32 %v119, 0.0
    %v125 = vmax.f32 %v122, 0.0
    %v126 = vperm.slane %v46, 0
    %v127 = vmul.f32 %v124, %v126
    %v128 = vmul.f32 %v125, %v126
    %vm129 = vcmask 130048
    %v131 = vsel %vm129, %v87, 0
    %v134 = vsel %vm129, %v88, 0
    %136 = vmatpush.msra.mxu0 0.0
    %137 = vmatpush.msra.mxu0 0.0
    %138 = vmatpush.msra.mxu0 0.0
    %139 = vmatpush.msra.mxu0 0.0
    %140 = vmatpush.msra.mxu0 0.0
    %141 = vmatpush.msra.mxu0 0.0
    %142 = vmatpush.msra.mxu0 0.0
    %143 = vmatpush.msra.mxu0 0.0
    %144 = vmatpush.msra.mxu0 0.0
    %145 = vmatpush.msra.mxu0 0.0
    %146 = vmatpush.msra.mxu0 0.0
    %147 = vmatpush.msra.mxu0 0.0
    %148 = vmatpush.msra.mxu0 0.0
    %149 = vmatpush.msra.mxu0 0.0
    %150 = vmatpush.msra.mxu0 %v128
    %151 = vmatpush.msra.mxu0 %v127
    %152 = vmatmul.f32.gmra.mxu0 %v131
    %v153 = vpop.f32.mrf.mxu0
    %v154 = vadd.f32 0.0, %v153
    %155 = vmatmul.f32.gmra.mxu0 %v134
    %v156 = vpop.f32.mrf.mxu0
    %v157 = vadd.f32 0.0, %v156
    %158 = vdwg.mxu0
    %163 = vrot.lane.b32.xlu0 %v47, 96
    %v164 = vpop.permute.xlu0 %163
    %165 = vrot.lane.b32.xlu0 %v48, 96
    %v166 = vpop.permute.xlu0 %165
    %167 = vrot.lane.b32.xlu0 %v49, 96
    %v168 = vpop.permute.xlu0 %167
    %169 = vrot.lane.b32.xlu0 %v50, 96
    %v170 = vpop.permute.xlu0 %169
    %vm175 = vcmask 261120
    %v177 = vsel %vm175, %v154, 0
    %v180 = vsel %vm175, %v157, 0
    %182 = vmatpush.msra.mxu0 0.0
    %183 = vmatpush.msra.mxu0 0.0
    %184 = vmatpush.msra.mxu0 0.0
    %185 = vmatpush.msra.mxu0 0.0
    %186 = vmatpush.msra.mxu0 0.0
    %187 = vmatpush.msra.mxu0 0.0
    %188 = vmatpush.msra.mxu0 0.0
    %189 = vmatpush.msra.mxu0 0.0
    %190 = vmatpush.msra.mxu0 0.0
    %191 = vmatpush.msra.mxu0 0.0
    %192 = vmatpush.msra.mxu0 0.0
    %193 = vmatpush.msra.mxu0 0.0
    %194 = vmatpush.msra.mxu0 %v170
    %195 = vmatpush.msra.mxu0 %v168
    %196 = vmatpush.msra.mxu0 %v166
    %197 = vmatpush.msra.mxu0 %v164
    %198 = vmatmul.f32.gmra.mxu0 %v177
    %v199 = vpop.f32.mrf.mxu0
    %v200 = vadd.f32 0.0, %v199
    %201 = vmatmul.f32.gmra.mxu0 %v180
    %v202 = vpop.f32.mrf.mxu0
    %v203 = vadd.f32 0.0, %v202
    %204 = vdwg.mxu0
    %v205 = vperm.slane %v46, 2
    %v206 = vmul.f32 %v200, %v205
    %v207 = vmul.f32 %v203, %v205
    %v208 = vperm.slane %v46, 4
    %v209 = vmul.f32 %v200, %v208
    %v210 = vmul.f32 %v203, %v208
    %v212 = vsel %vm175, %v91, 0
    %v215 = vsel %vm175, %v92, 0
    %v218 = vsel %vm175, %v93, 0
    %v221 = vsel %vm175, %v94, 0
    %223 = vmatpush.msra.mxu0 0.0
    %224 = vmatpush.msra.mxu0 0.0
    %225 = vmatpush.msra.mxu0 0.0
    %226 = vmatpush.msra.mxu0 0.0
    %227 = vmatpush.msra.mxu0 0.0
    %228 = vmatpush.msra.mxu0 0.0
    %229 = vmatpush.msra.mxu0 0.0
    %230 = vmatpush.msra.mxu0 0.0
    %231 = vmatpush.msra.mxu0 0.0
    %232 = vmatpush.msra.mxu0 0.0
    %233 = vmatpush.msra.mxu0 0.0
    %234 = vmatpush.msra.mxu0 0.0
    %235 = vmatpush.msra.mxu0 %v210
    %236 = vmatpush.msra.mxu0 %v209
    %237 = vmatpush.msra.mxu0 %v207
    %238 = vmatpush.msra.mxu0 %v206
    %239 = vmatmul.f32.gmra.mxu0 %v212
    %v240 = vpop.f32.mrf.mxu0
    %v241 = vadd.f32 0.0, %v240
    %242 = vmatmul.f32.gmra.mxu0 %v215
    %v243 = vpop.f32.mrf.mxu0
    %v244 = vadd.f32 0.0, %v243
    %245 = vmatmul.f32.gmra.mxu0 %v218
    %v246 = vpop.f32.mrf.mxu0
    %v247 = vadd.f32 0.0, %v246
    %248 = vmatmul.f32.gmra.mxu0 %v221
    %v249 = vpop.f32.mrf.mxu0
    %v250 = vadd.f32 0.0, %v249
    %251 = vdwg.mxu0
    %v253 = vsel %vm175, %v241, 0
    %v256 = vsel %vm175, %v244, 0
    %v259 = vsel %vm175, %v247, 0
    %v262 = vsel %vm175, %v250, 0
    %264 = vmatpush.msra.mxu0 0.0
    %265 = vmatpush.msra.mxu0 0.0
    %266 = vmatpush.msra.mxu0 0.0
    %267 = vmatpush.msra.mxu0 0.0
    %268 = vmatpush.msra.mxu0 0.0
    %269 = vmatpush.msra.mxu0 0.0
    %270 = vmatpush.msra.mxu0 0.0
    %271 = vmatpush.msra.mxu0 0.0
    %272 = vmatpush.msra.mxu0 0.0
    %273 = vmatpush.msra.mxu0 0.0
    %274 = vmatpush.msra.mxu0 0.0
    %275 = vmatpush.msra.mxu0 0.0
    %276 = vmatpush.msra.mxu0 %v50
    %277 = vmatpush.msra.mxu0 %v49
    %278 = vmatpush.msra.mxu0 %v48
    %279 = vmatpush.msra.mxu0 %v47
    %280 = vmatmul.f32.gmra.mxu0 %v253
    %v281 = vpop.f32.mrf.mxu0
    %v282 = vadd.f32 0.0, %v281
    %283 = vmatmul.f32.gmra.mxu0 %v256
    %v284 = vpop.f32.mrf.mxu0
    %v285 = vadd.f32 0.0, %v284
    %286 = vmatmul.f32.gmra.mxu0 %v259
    %v287 = vpop.f32.mrf.mxu0
    %v288 = vadd.f32 0.0, %v287
    %289 = vmatmul.f32.gmra.mxu0 %v262
    %v290 = vpop.f32.mrf.mxu0
    %v291 = vadd.f32 0.0, %v290
    %292 = vdwg.mxu0
    %v293 = vperm.slane %v46, 3
    %v294 = vmul.f32 %v282, %v293
    %v295 = vmul.f32 %v285, %v293
    %v296 = vperm.slane %v46, 5
    %v297 = vmul.f32 %v288, %v296
    %v298 = vmul.f32 %v291, %v296
    %v300 = vsel %vm175, %v95, 0
    %v303 = vsel %vm175, %v96, 0
    %v306 = vsel %vm175, %v97, 0
    %v309 = vsel %vm175, %v98, 0
    %311 = vmatpush.msra.mxu0 0.0
    %312 = vmatpush.msra.mxu0 0.0
    %313 = vmatpush.msra.mxu0 0.0
    %314 = vmatpush.msra.mxu0 0.0
    %315 = vmatpush.msra.mxu0 0.0
    %316 = vmatpush.msra.mxu0 0.0
    %317 = vmatpush.msra.mxu0 0.0
    %318 = vmatpush.msra.mxu0 0.0
    %319 = vmatpush.msra.mxu0 0.0
    %320 = vmatpush.msra.mxu0 0.0
    %321 = vmatpush.msra.mxu0 0.0
    %322 = vmatpush.msra.mxu0 0.0
    %323 = vmatpush.msra.mxu0 %v298
    %324 = vmatpush.msra.mxu0 %v297
    %325 = vmatpush.msra.mxu0 %v295
    %326 = vmatpush.msra.mxu0 %v294
    %327 = vmatmul.f32.gmra.mxu0 %v300
    %v328 = vpop.f32.mrf.mxu0
    %v329 = vadd.f32 0.0, %v328
    %330 = vmatmul.f32.gmra.mxu0 %v303
    %v331 = vpop.f32.mrf.mxu0
    %v332 = vadd.f32 0.0, %v331
    %333 = vmatmul.f32.gmra.mxu0 %v306
    %v334 = vpop.f32.mrf.mxu0
    %v335 = vadd.f32 0.0, %v334
    %336 = vmatmul.f32.gmra.mxu0 %v309
    %v337 = vpop.f32.mrf.mxu0
    %v338 = vadd.f32 0.0, %v337
    %339 = vdwg.mxu0
    %v341 = vsel %vm175, %v329, 0
    %v344 = vsel %vm175, %v332, 0
    %v347 = vsel %vm175, %v335, 0
    %v350 = vsel %vm175, %v338, 0
    %352 = vmatpush.msra.mxu0 0.0
    %353 = vmatpush.msra.mxu0 0.0
    %354 = vmatpush.msra.mxu0 0.0
    %355 = vmatpush.msra.mxu0 0.0
    %356 = vmatpush.msra.mxu0 0.0
    %357 = vmatpush.msra.mxu0 0.0
    %358 = vmatpush.msra.mxu0 0.0
    %359 = vmatpush.msra.mxu0 0.0
    %360 = vmatpush.msra.mxu0 0.0
    %361 = vmatpush.msra.mxu0 0.0
    %362 = vmatpush.msra.mxu0 0.0
    %363 = vmatpush.msra.mxu0 0.0
    %364 = vmatpush.msra.mxu0 %v170
    %365 = vmatpush.msra.mxu0 %v168
    %366 = vmatpush.msra.mxu0 %v166
    %367 = vmatpush.msra.mxu0 %v164
    %368 = vmatmul.f32.gmra.mxu0 %v341
    %v369 = vpop.f32.mrf.mxu0
    %v370 = vadd.f32 0.0, %v369
    %371 = vmatmul.f32.gmra.mxu0 %v344
    %v372 = vpop.f32.mrf.mxu0
    %v373 = vadd.f32 0.0, %v372
    %374 = vmatmul.f32.gmra.mxu0 %v347
    %v375 = vpop.f32.mrf.mxu0
    %v376 = vadd.f32 0.0, %v375
    %377 = vmatmul.f32.gmra.mxu0 %v350
    %v378 = vpop.f32.mrf.mxu0
    %v379 = vadd.f32 0.0, %v378
    %380 = vdwg.mxu0
    %v381 = vperm.slane %v46, 1
    %v382 = vmul.f32 %v200, %v381
    %v383 = vmul.f32 %v203, %v381
    %v384 = vmul.f32 %v370, %v381
    %v385 = vmul.f32 %v373, %v381
    %v386 = vmul.f32 %v376, %v381
    %v387 = vmul.f32 %v379, %v381
    %390 = vrot.lane.b32.xlu0 %v384, 32
    %v391 = vpop.permute.xlu0 %390
    %392 = vrot.lane.b32.xlu0 %v385, 32
    %v393 = vpop.permute.xlu0 %392
    %398 = vrot.lane.b32.xlu0 %v386, 64
    %v399 = vpop.permute.xlu0 %398
    %400 = vrot.lane.b32.xlu0 %v387, 64
    %v401 = vpop.permute.xlu0 %400
    %v404 = vsel %vm175, %v382, %v391
    %v405 = vsel %vm175, %v383, %v393
    %vm406 = vcmask 523264
    %v407 = vsel %vm406, %v404, %v399
    %v408 = vsel %vm406, %v405, %v401
    %v410 = vsel %vm129, %v89, 0
    %v413 = vsel %vm129, %v90, 0
    %415 = vmatpush.msra.mxu0 0.0
    %416 = vmatpush.msra.mxu0 0.0
    %417 = vmatpush.msra.mxu0 0.0
    %418 = vmatpush.msra.mxu0 0.0
    %419 = vmatpush.msra.mxu0 0.0
    %420 = vmatpush.msra.mxu0 0.0
    %421 = vmatpush.msra.mxu0 0.0
    %422 = vmatpush.msra.mxu0 0.0
    %423 = vmatpush.msra.mxu0 0.0
    %424 = vmatpush.msra.mxu0 0.0
    %425 = vmatpush.msra.mxu0 0.0
    %426 = vmatpush.msra.mxu0 0.0
    %427 = vmatpush.msra.mxu0 0.0
    %428 = vmatpush.msra.mxu0 0.0
    %429 = vmatpush.msra.mxu0 %v408
    %430 = vmatpush.msra.mxu0 %v407
    %431 = vmatmul.f32.gmra.mxu0 %v410
    %v432 = vpop.f32.mrf.mxu0
    %v433 = vadd.f32 0.0, %v432
    %434 = vmatmul.f32.gmra.mxu0 %v413
    %v435 = vpop.f32.mrf.mxu0
    %v436 = vadd.f32 0.0, %v435
    %437 = vdwg.mxu0
    %vm438 = vcmask 785408
    %v440 = vsel %vm438, %v433, 0
    %v443 = vsel %vm438, %v436, 0
    %445 = vmatpush.msra.mxu0 0.0
    %446 = vmatpush.msra.mxu0 0.0
    %447 = vmatpush.msra.mxu0 0.0
    %448 = vmatpush.msra.mxu0 0.0
    %449 = vmatpush.msra.mxu0 %v62
    %450 = vmatpush.msra.mxu0 %v61
    %451 = vmatpush.msra.mxu0 %v60
    %452 = vmatpush.msra.mxu0 %v59
    %453 = vmatpush.msra.mxu0 %v58
    %454 = vmatpush.msra.mxu0 %v57
    %455 = vmatpush.msra.mxu0 %v56
    %456 = vmatpush.msra.mxu0 %v55
    %457 = vmatpush.msra.mxu0 %v54
    %458 = vmatpush.msra.mxu0 %v53
    %459 = vmatpush.msra.mxu0 %v52
    %460 = vmatpush.msra.mxu0 %v51
    %461 = vmatmul.f32.gmra.mxu0 %v440
    %v462 = vpop.f32.mrf.mxu0
    %v463 = vadd.f32 0.0, %v462
    %464 = vmatmul.f32.gmra.mxu0 %v443
    %v465 = vpop.f32.mrf.mxu0
    %v466 = vadd.f32 0.0, %v465
    %467 = vdwg.mxu0
    %v469 = vsel %vm438, %v463, 0
    %v472 = vsel %vm438, %v466, 0
    %474 = vmatpush.msra.mxu0 0.0
    %475 = vmatpush.msra.mxu0 0.0
    %476 = vmatpush.msra.mxu0 0.0
    %477 = vmatpush.msra.mxu0 0.0
    %478 = vmatpush.msra.mxu0 %v74
    %479 = vmatpush.msra.mxu0 %v73
    %480 = vmatpush.msra.mxu0 %v72
    %481 = vmatpush.msra.mxu0 %v71
    %482 = vmatpush.msra.mxu0 %v70
    %483 = vmatpush.msra.mxu0 %v69
    %484 = vmatpush.msra.mxu0 %v68
    %485 = vmatpush.msra.mxu0 %v67
    %486 = vmatpush.msra.mxu0 %v66
    %487 = vmatpush.msra.mxu0 %v65
    %488 = vmatpush.msra.mxu0 %v64
    %489 = vmatpush.msra.mxu0 %v63
    %490 = vmatmul.f32.gmra.mxu0 %v469
    %v491 = vpop.f32.mrf.mxu0
    %v492 = vadd.f32 0.0, %v491
    %493 = vmatmul.f32.gmra.mxu0 %v472
    %v494 = vpop.f32.mrf.mxu0
    %v495 = vadd.f32 0.0, %v494
    %496 = vdwg.mxu0
    %vm497 = vcmask 392192
    %v499 = vsel %vm497, %v492, 0
    %v502 = vsel %vm497, %v495, 0
    %504 = vmatpush.msra.mxu0 0.0
    %505 = vmatpush.msra.mxu0 0.0
    %506 = vmatpush.msra.mxu0 0.0
    %507 = vmatpush.msra.mxu0 0.0
    %508 = vmatpush.msra.mxu0 0.0
    %509 = vmatpush.msra.mxu0 0.0
    %510 = vmatpush.msra.mxu0 0.0
    %511 = vmatpush.msra.mxu0 0.0
    %512 = vmatpush.msra.mxu0 0.0
    %513 = vmatpush.msra.mxu0 0.0
    %514 = vmatpush.msra.mxu0 %v80
    %515 = vmatpush.msra.mxu0 %v79
    %516 = vmatpush.msra.mxu0 %v78
    %517 = vmatpush.msra.mxu0 %v77
    %518 = vmatpush.msra.mxu0 %v76
    %519 = vmatpush.msra.mxu0 %v75
    %520 = vmatmul.f32.gmra.mxu0 %v499
    %v521 = vpop.f32.mrf.mxu0
    %v522 = vadd.f32 0.0, %v521
    %523 = vmatmul.f32.gmra.mxu0 %v502
    %v524 = vpop.f32.mrf.mxu0
    %v525 = vadd.f32 0.0, %v524
    %526 = vdwg.mxu0
    %vm527 = vcmask 195584
    %v529 = vsel %vm527, %v522, 0
    %v532 = vsel %vm527, %v525, 0
    %534 = vmatpush.msra.mxu0 0.0
    %535 = vmatpush.msra.mxu0 0.0
    %536 = vmatpush.msra.mxu0 0.0
    %537 = vmatpush.msra.mxu0 0.0
    %538 = vmatpush.msra.mxu0 0.0
    %539 = vmatpush.msra.mxu0 0.0
    %540 = vmatpush.msra.mxu0 0.0
    %541 = vmatpush.msra.mxu0 0.0
    %542 = vmatpush.msra.mxu0 0.0
    %543 = vmatpush.msra.mxu0 0.0
    %544 = vmatpush.msra.mxu0 0.0
    %545 = vmatpush.msra.mxu0 0.0
    %546 = vmatpush.msra.mxu0 0.0
    %547 = vmatpush.msra.mxu0 %v83
    %548 = vmatpush.msra.mxu0 %v82
    %549 = vmatpush.msra.mxu0 %v81
    %550 = vmatmul.f32.gmra.mxu0 %v529
    %v551 = vpop.f32.mrf.mxu0
    %v552 = vadd.f32 0.0, %v551
    %553 = vmatmul.f32.gmra.mxu0 %v532
    %v554 = vpop.f32.mrf.mxu0
    %v555 = vadd.f32 0.0, %v554
    %556 = vdwg.mxu0
    %563 = vrot.lane.b32.xlu0 %v75, 104
    %v564 = vpop.permute.xlu0 %563
    %565 = vrot.lane.b32.xlu0 %v76, 104
    %v566 = vpop.permute.xlu0 %565
    %567 = vrot.lane.b32.xlu0 %v77, 104
    %v568 = vpop.permute.xlu0 %567
    %569 = vrot.lane.b32.xlu0 %v78, 104
    %v570 = vpop.permute.xlu0 %569
    %571 = vrot.lane.b32.xlu0 %v79, 104
    %v572 = vpop.permute.xlu0 %571
    %573 = vrot.lane.b32.xlu0 %v80, 104
    %v574 = vpop.permute.xlu0 %573
    %v582 = vsel %vm497, %v552, 0
    %v585 = vsel %vm497, %v555, 0
    %587 = vmatpush.msra.mxu0 0.0
    %588 = vmatpush.msra.mxu0 0.0
    %589 = vmatpush.msra.mxu0 0.0
    %590 = vmatpush.msra.mxu0 0.0
    %591 = vmatpush.msra.mxu0 0.0
    %592 = vmatpush.msra.mxu0 0.0
    %593 = vmatpush.msra.mxu0 0.0
    %594 = vmatpush.msra.mxu0 0.0
    %595 = vmatpush.msra.mxu0 0.0
    %596 = vmatpush.msra.mxu0 0.0
    %597 = vmatpush.msra.mxu0 %v574
    %598 = vmatpush.msra.mxu0 %v572
    %599 = vmatpush.msra.mxu0 %v570
    %600 = vmatpush.msra.mxu0 %v568
    %601 = vmatpush.msra.mxu0 %v566
    %602 = vmatpush.msra.mxu0 %v564
    %603 = vmatmul.f32.gmra.mxu0 %v582
    %v604 = vpop.f32.mrf.mxu0
    %v605 = vadd.f32 0.0, %v604
    %606 = vmatmul.f32.gmra.mxu0 %v585
    %v607 = vpop.f32.mrf.mxu0
    %v608 = vadd.f32 0.0, %v607
    %609 = vdwg.mxu0
    %v610 = vsub.f32 %v605, %v463
    %v611 = vsub.f32 %v608, %v466
    %v612 = vmul.f32 %v610, %v610
    %v613 = vmul.f32 %v611, %v611
    %v614 = vsel %vm438, %v612, 0.0
    %v615 = vsel %vm438, %v613, 0.0
    %v616 = vadd.f32 %v614, %v615
    %617 = vadd.xlane.f32.xlu0 %v616
    %v618 = vpop.xlane.xlu0 %617
    %v619 = vrot.slane %v618, 4
    %v620 = vadd.f32 %v618, %v619
    %v621 = vrot.slane %v620, 2
    %v622 = vadd.f32 %v620, %v621
    %v623 = vrot.slane %v622, 1
    %v624 = vadd.f32 %v622, %v623
    %s625 = vtos %v624
    %v626 = vstv %s625
    %v627 = vrcp.pop 512.0
    %v628 = vmul.f32 512.0, %v627
    %v629 = vsub.f32 1.0, %v628
    %v630 = vmul.f32 %v627, %v629
    %v631 = vadd.f32 %v627, %v630
    %vm632 = vweird.f32 %v627
    %v633 = vsel %vm632, %v627, %v631
    %v634 = vmul.f32 %v626, %v633
    %638 = vrot.lane.b32.xlu0 %v81, 80
    %v639 = vpop.permute.xlu0 %638
    %640 = vrot.lane.b32.xlu0 %v82, 80
    %v641 = vpop.permute.xlu0 %640
    %642 = vrot.lane.b32.xlu0 %v83, 80
    %v643 = vpop.permute.xlu0 %642
    %v644 = vsel %vm497, %v639, 0
    %v646 = vsel %vm497, %v641, 0
    %v648 = vsel %vm497, %v643, 0
    %650 = vmatpush.xpose.msra.mxu0 0.0
    %651 = vmatpush.xpose.msra.mxu0 0.0
    %652 = vmatpush.xpose.msra.mxu0 0.0
    %653 = vmatpush.xpose.msra.mxu0 0.0
    %654 = vmatpush.xpose.msra.mxu0 0.0
    %655 = vmatpush.xpose.msra.mxu0 0.0
    %656 = vmatpush.xpose.msra.mxu0 0.0
    %657 = vmatpush.xpose.msra.mxu0 0.0
    %658 = vmatpush.xpose.msra.mxu0 0.0
    %659 = vmatpush.xpose.msra.mxu0 0.0
    %660 = vmatpush.xpose.msra.mxu0 0.0
    %661 = vmatpush.xpose.msra.mxu0 0.0
    %662 = vmatpush.xpose.msra.mxu0 0.0
    %663 = vmatpush.xpose.msra.mxu0 %v648
    %664 = vmatpush.xpose.msra.mxu0 %v646
    %665 = vmatpush.xpose.msra.mxu0 %v644
    %666 = vmatmul.f32.gmra.mxu0 %v644
    %v667 = vpop.f32.mrf.mxu0
    %v668 = vadd.f32 0.0, %v667
    %669 = vmatmul.f32.gmra.mxu0 %v646
    %v670 = vpop.f32.mrf.mxu0
    %v671 = vadd.f32 0.0, %v670
    %672 = vmatmul.f32.gmra.mxu0 %v648
    %v673 = vpop.f32.mrf.mxu0
    %v674 = vadd.f32 0.0, %v673
    %675 = vdwg.mxu0
    %v676 = vsel %vm497, %v81, 0
    %v678 = vsel %vm497, %v82, 0
    %v680 = vsel %vm497, %v83, 0
    %682 = vmatpush.xpose.msra.mxu0 0.0
    %683 = vmatpush.xpose.msra.mxu0 0.0
    %684 = vmatpush.xpose.msra.mxu0 0.0
    %685 = vmatpush.xpose.msra.mxu0 0.0
    %686 = vmatpush.xpose.msra.mxu0 0.0
    %687 = vmatpush.xpose.msra.mxu0 0.0
    %688 = vmatpush.xpose.msra.mxu0 0.0
    %689 = vmatpush.xpose.msra.mxu0 0.0
    %690 = vmatpush.xpose.msra.mxu0 0.0
    %691 = vmatpush.xpose.msra.mxu0 0.0
    %692 = vmatpush.xpose.msra.mxu0 0.0
    %693 = vmatpush.xpose.msra.mxu0 0.0
    %694 = vmatpush.xpose.msra.mxu0 0.0
    %695 = vmatpush.xpose.msra.mxu0 %v680
    %696 = vmatpush.xpose.msra.mxu0 %v678
    %697 = vmatpush.xpose.msra.mxu0 %v676
    %698 = vmatmul.f32.gmra.mxu0 %v676
    %v699 = vpop.f32.mrf.mxu0
    %v700 = vadd.f32 0.0, %v699
    %701 = vmatmul.f32.gmra.mxu0 %v678
    %v702 = vpop.f32.mrf.mxu0
    %v703 = vadd.f32 0.0, %v702
    %704 = vmatmul.f32.gmra.mxu0 %v680
    %v705 = vpop.f32.mrf.mxu0
    %v706 = vadd.f32 0.0, %v705
    %707 = vdwg.mxu0
    %v708 = vlaneseq
    %v709 = vshrl.u32 %v708, 7
    %v710 = vadd.s32 %v709, 8
    %v711 = vadd.s32 %v709, 16
    %v712 = vlaneseq
    %v713 = vand.u32 %v712, 127
    %vm714 = vcmp.eq.s32.totalorder %v709, %v713
    %vm715 = vcmp.eq.s32.totalorder %v710, %v713
    %vm716 = vcmp.eq.s32.totalorder %v711, %v713
    %v717 = vsel %vm714, 1, 0
    %v718 = vsel %vm715, 1, 0
    %v719 = vsel %vm716, 1, 0
    %v720 = vcvt.s32.f32 %v717
    %v721 = vcvt.s32.f32 %v718
    %v722 = vcvt.s32.f32 %v719
    %v723 = vsub.f32 %v668, %v720
    %v724 = vsub.f32 %v671, %v721
    %v725 = vsub.f32 %v674, %v722
    %v726 = vsub.f32 %v700, %v720
    %v727 = vsub.f32 %v703, %v721
    %v728 = vsub.f32 %v706, %v722
    %v729 = vmul.f32 %v723, %v723
    %v730 = vmul.f32 %v724, %v724
    %v731 = vmul.f32 %v725, %v725
    %v732 = vsel %vm527, %v729, 0.0
    %v733 = vsel %vm527, %v730, 0.0
    %v734 = vadd.f32 %v732, %v733
    %v735 = vsel %vm527, %v731, 0.0
    %v736 = vadd.f32 %v734, %v735
    %737 = vadd.xlane.f32.xlu0 %v736
    %v738 = vpop.xlane.xlu0 %737
    %v739 = vrot.slane %v738, 4
    %v740 = vadd.f32 %v738, %v739
    %v741 = vrot.slane %v740, 2
    %v742 = vadd.f32 %v740, %v741
    %v743 = vrot.slane %v742, 1
    %v744 = vadd.f32 %v742, %v743
    %s745 = vtos %v744
    %v746 = vstv %s745
    %v747 = vmul.f32 %v726, %v726
    %v748 = vmul.f32 %v727, %v727
    %v749 = vmul.f32 %v728, %v728
    %v750 = vsel %vm527, %v747, 0.0
    %v751 = vsel %vm527, %v748, 0.0
    %v752 = vadd.f32 %v750, %v751
    %v753 = vsel %vm527, %v749, 0.0
    %v754 = vadd.f32 %v752, %v753
    %755 = vadd.xlane.f32.xlu0 %v754
    %v756 = vpop.xlane.xlu0 %755
    %v757 = vrot.slane %v756, 4
    %v758 = vadd.f32 %v756, %v757
    %v759 = vrot.slane %v758, 2
    %v760 = vadd.f32 %v758, %v759
    %v761 = vrot.slane %v760, 1
    %v762 = vadd.f32 %v760, %v761
    %s763 = vtos %v762
    %v764 = vstv %s763
    %v765 = vadd.f32 %v746, %v764
    %v766 = vrcp.pop 576.0
    %v767 = vmul.f32 576.0, %v766
    %v768 = vsub.f32 1.0, %v767
    %v769 = vmul.f32 %v766, %v768
    %v770 = vadd.f32 %v766, %v769
    %vm771 = vweird.f32 %v766
    %v772 = vsel %vm771, %v766, %v770
    %v773 = vmul.f32 %v765, %v772
    %v774 = vadd.f32 %v634, %v773
    %vm775 = vcmp.eq.s32.totalorder %v713, 28
    %v776 = vsel %vm775, 1, 0
    %v777 = vcvt.s32.f32 %v776
    %v778 = vmul.f32 %v777, %v774
    %779 = vmatpush.msra.mxu0 0.0
    %780 = vmatpush.msra.mxu0 0.0
    %781 = vmatpush.msra.mxu0 0.0
    %782 = vmatpush.msra.mxu0 0.0
    %783 = vmatpush.msra.mxu0 0.0
    %784 = vmatpush.msra.mxu0 0.0
    %785 = vmatpush.msra.mxu0 0.0
    %786 = vmatpush.msra.mxu0 0.0
    %787 = vmatpush.msra.mxu0 0.0
    %788 = vmatpush.msra.mxu0 0.0
    %789 = vmatpush.msra.mxu0 0.0
    %790 = vmatpush.msra.mxu0 0.0
    %791 = vmatpush.msra.mxu0 0.0
    %792 = vmatpush.msra.mxu0 %v86
    %793 = vmatpush.msra.mxu0 %v85
    %794 = vmatpush.msra.mxu0 %v84
    %795 = vmatmul.f32.gmra.mxu0 %v529
    %v796 = vpop.f32.mrf.mxu0
    %v797 = vadd.f32 %v778, %v796
    %798 = vmatmul.f32.gmra.mxu0 %v532
    %v799 = vpop.f32.mrf.mxu0
    %v800 = vadd.f32 %v778, %v799
    %801 = vdwg.mxu0
    %802 = vst [vmem:[%s3] sm:$0xff] %v797
    %803 = vst [vmem:[%s3 + $0x8] sm:$0xff] %v800
    // Predicated region
    $region18: #{dblp_forward.1} parent=1 // pred_check
      _
    $region19: #{dblp_forward.1} parent=1 // pred_check_branch
      %805 = sbr.rel (0) target = $region21
    $region20: #{dblp_forward.1} parent=1 // pred_region
      _
    $region21: #{dblp_forward.1} parent=1 // pred_fallthru
      _
    // Predicated region
    $region22: #{dblp_forward.1} parent=1 // pred_check
      _
    $region23: #{dblp_forward.1} parent=1 // pred_check_branch
      %807 = sbr.rel (0) target = $region25
    $region24: #{dblp_forward.1} parent=1 // pred_region
      _
    $region25: #{dblp_forward.1} parent=1 // pred_fallthru
      _
    %808 = vsyncpa [#allocation3], 1

</llo_original>
